<compile_context>
chip_gen: v7x
topology: tpu7x:2x2x1
jax: 0.10.0
libtpu: 0.0.40
codegen_flags: <defaults>
</compile_context>

<pallas_src>
import jax
import jax.numpy as jnp
from jax.experimental import pallas as pl
from jax.experimental.pallas import tpu as pltpu


def monoton_mlp_kernel(x_ref, w1_ref, b1_ref, w2_ref, b2_ref, w3_ref, b3_ref,
                       o_ref):
    x = x_ref[...]                      # (in_dim, bb) f32, batch on lanes
    bb = x.shape[1]
    H = w1_ref.shape[0]

    # Sublane-parity mask (H lives on the sublane axis), built once per tile and
    # reused by both GroupSort2 calls.
    row_idx = jax.lax.broadcasted_iota(jnp.int32, (H, bb), dimension=0)
    is_even = (row_idx % 2) == 0

    def groupsort2(h):
        # MaxMin over adjacent feature pairs along the sublane (H) axis.
        # H is even, so the circular wrap rows are never selected.
        nxt = pltpu.roll(h, shift=H - 1, axis=0)   # out[i] = h[i + 1]
        prv = pltpu.roll(h, shift=1, axis=0)       # out[i] = h[i - 1]
        return jnp.where(is_even, jnp.minimum(h, nxt), jnp.maximum(h, prv))

    # Layer 1 (W1 pre-clipped to [-1, 1] in the wrapper): (H, in) @ (in, bb) -> (H, bb)
    h = jnp.dot(w1_ref[...], x, preferred_element_type=jnp.float32) + b1_ref[...]
    h = groupsort2(h)

    # Layer 2 (W2 pre inf-norm normalized): (H, H) @ (H, bb) -> (H, bb)
    h = jnp.dot(w2_ref[...], h, preferred_element_type=jnp.float32) + b2_ref[...]
    h = groupsort2(h)

    # Layer 3 (W3 pre inf-norm normalized): (1, H) @ (H, bb) -> (1, bb), lane-dense store.
    o = jnp.dot(w3_ref[...], h, preferred_element_type=jnp.float32)
    o_ref[...] = o + b3_ref[0]          # scalar bias from SMEM


def _round_up(v, m):
    return ((v + m - 1) // m) * m


def monoton_mlp_forward(x, params, *, block_b=16384):
    """Forward pass. x: (B, in_dim) f32. Returns (B, 1) f32."""
    w1, b1, w2, b2, w3, b3 = params
    B, in_dim = x.shape
    H = w1.shape[0]
    assert H % 2 == 0

    # --- weight normalization hoisted out of the grid loop (once per call) ---
    w1n = jnp.clip(w1, -1.0, 1.0).astype(jnp.float32)                       # one-inf norm
    w2n = (w2 / jnp.maximum(1.0, jnp.sum(jnp.abs(w2), axis=1,
                                         keepdims=True))).astype(jnp.float32)
    w3n = (w3 / jnp.maximum(1.0, jnp.sum(jnp.abs(w3), axis=1,
                                         keepdims=True))).astype(jnp.float32)

    b1_col = b1.reshape(H, 1).astype(jnp.float32)    # (H, 1): broadcast along lanes
    b2_col = b2.reshape(H, 1).astype(jnp.float32)
    b3_1d = b3.reshape(1).astype(jnp.float32)        # scalar -> SMEM

    # --- batch tiling: 128-aligned lane-dense tiles; >=2 tiles once the batch is
    #     large enough so a 2-TensorCore chip (v7x) can shard the parallel grid axis ---
    if B <= 256:
        bb = _round_up(max(B, 1), 128)                       # single small tile
    else:
        bb = min(block_b, _round_up(pl.cdiv(B, 2), 128))     # >=2 tiles, capped at block_b
    Bp = _round_up(B, bb)

    # Lane-dense, batch-on-lanes layout: x^T is (in_dim, Bp); padded cols sliced off below.
    x_t = x.astype(jnp.float32).T
    if Bp != B:
        x_t = jnp.pad(x_t, ((0, 0), (0, Bp - B)))

    const = lambda i: (0, 0)         # weights/biases resident across all batch tiles

    flops = 2 * Bp * (in_dim * H + H * H + H)
    bytes_accessed = (Bp * in_dim + Bp + H * in_dim + H * H + 3 * H + 1) * 4

    out_lane = pl.pallas_call(
        monoton_mlp_kernel,
        out_shape=jax.ShapeDtypeStruct((1, Bp), jnp.float32),
        grid=(Bp // bb,),
        in_specs=[
            pl.BlockSpec((in_dim, bb), lambda i: (0, i)),    # x^T batch tile (lane-dense)
            pl.BlockSpec((H, in_dim), const),                # W1 (out, in), pre-normalized
            pl.BlockSpec((H, 1), const),                     # b1 (column)
            pl.BlockSpec((H, H), const),                     # W2, pre-normalized
            pl.BlockSpec((H, 1), const),                     # b2 (column)
            pl.BlockSpec((1, H), const),                     # W3, pre-normalized
            pl.BlockSpec(memory_space=pltpu.MemorySpace.SMEM),  # b3 scalar in SMEM
        ],
        out_specs=pl.BlockSpec((1, bb), lambda i: (0, i)),   # lane-dense: batch on lanes
        compiler_params=pltpu.CompilerParams(
            dimension_semantics=("parallel",),
            vmem_limit_bytes=48 * 1024 * 1024),              # big tiles fit on v5e too
        cost_estimate=pl.CostEstimate(flops=flops, transcendentals=0,
                                      bytes_accessed=bytes_accessed),
    )(x_t, w1n, b1_col, w2n, b2_col, w3n, b3_1d)

    return out_lane[0, :B].reshape(B, 1)


def init_params(key, input_size, hidden_size):
    # Deterministic stand-in for torch.nn.Linear default init:
    # U(-1/sqrt(fan_in), 1/sqrt(fan_in)) for weight and bias.
    ks = jax.random.split(key, 6)

    def lin(kw, kb, fan_in, fan_out):
        bound = 1.0 / jnp.sqrt(jnp.float32(fan_in))
        w = jax.random.uniform(kw, (fan_out, fan_in), jnp.float32, -bound, bound)
        b = jax.random.uniform(kb, (fan_out,), jnp.float32, -bound, bound)
        return w, b

    w1, b1 = lin(ks[0], ks[1], input_size, hidden_size)
    w2, b2 = lin(ks[2], ks[3], hidden_size, hidden_size)
    w3, b3 = lin(ks[4], ks[5], hidden_size, 1)
    return w1, b1, w2, b2, w3, b3


def reference_forward(x, params):
    # Pure-JAX reference with identical semantics (for validation).
    w1, b1, w2, b2, w3, b3 = params

    def gs2(h):
        B, H = h.shape
        return jnp.sort(h.reshape(B, H // 2, 2), axis=-1).reshape(B, H)

    w1n = jnp.clip(w1, -1.0, 1.0)
    h = x @ w1n.T + b1
    h = gs2(h)
    w2n = w2 / jnp.maximum(1.0, jnp.sum(jnp.abs(w2), axis=1, keepdims=True))
    h = h @ w2n.T + b2
    h = gs2(h)
    w3n = w3 / jnp.maximum(1.0, jnp.sum(jnp.abs(w3), axis=1, keepdims=True))
    return h @ w3n.T + b3


if __name__ == "__main__":
    input_size, hidden_size, random_state = 16, 32, 0

    key = jax.random.PRNGKey(random_state)
    kx, kp = jax.random.split(key)
    params = init_params(kp, input_size, hidden_size)

    # Small single-tile check.
    batch = 16
    x = jax.random.normal(kx, (batch, input_size), dtype=jnp.float32)
    out = jax.block_until_ready(monoton_mlp_forward(x, params))
    ref = reference_forward(x, params)
    assert out.shape == (batch, 1)
    assert jnp.allclose(out, ref, atol=1e-5, rtol=1e-5), "kernel != reference (single tile)"

    # Ragged multi-tile check (exercises padding + grid > 1 with a small tile).
    batch2 = 300
    x2 = jax.random.normal(jax.random.split(kx)[0], (batch2, input_size), dtype=jnp.float32)
    out2 = jax.block_until_ready(monoton_mlp_forward(x2, params, block_b=128))
    ref2 = reference_forward(x2, params)
    assert out2.shape == (batch2, 1)
    assert jnp.allclose(out2, ref2, atol=1e-5, rtol=1e-5), "kernel != reference (multi tile)"

    print("KERNEL_OK")
</pallas_src>

<mosaic_0001>
module attributes {stable_mosaic.version = 11 : i64} {
  func.func @monoton_mlp_kernel(%arg0: i32, %arg1: memref<16x128xf32, #tpu.memory_space<vmem>>, %arg2: memref<32x16xf32, #tpu.memory_space<vmem>>, %arg3: memref<32x1xf32, #tpu.memory_space<vmem>>, %arg4: memref<32x32xf32, #tpu.memory_space<vmem>>, %arg5: memref<32x1xf32, #tpu.memory_space<vmem>>, %arg6: memref<1x32xf32, #tpu.memory_space<vmem>>, %arg7: memref<1xf32, #tpu.memory_space<smem>>, %arg8: memref<1x128xf32, #tpu.memory_space<vmem>>) attributes {dimension_semantics = [#tpu.dimension_semantics<parallel>], iteration_bounds = array<i64: 1>, scalar_prefetch = 0 : i64, scratch_operands = 0 : i64, tpu.core_type = #tpu.core_type<tc>, window_params = [{transform_indices = @transform_0, window_bounds = array<i64: 16, 128>}, {pipeline_mode = #tpu.pipeline_mode<synchronous>, transform_indices = @transform_1, window_bounds = array<i64: 32, 16>}, {pipeline_mode = #tpu.pipeline_mode<synchronous>, transform_indices = @transform_2, window_bounds = array<i64: 32, 1>}, {pipeline_mode = #tpu.pipeline_mode<synchronous>, transform_indices = @transform_3, window_bounds = array<i64: 32, 32>}, {pipeline_mode = #tpu.pipeline_mode<synchronous>, transform_indices = @transform_4, window_bounds = array<i64: 32, 1>}, {pipeline_mode = #tpu.pipeline_mode<synchronous>, transform_indices = @transform_5, window_bounds = array<i64: 1, 32>}, {transform_indices = @transform_6, window_bounds = array<i64: 1>}, {transform_indices = @transform_7, window_bounds = array<i64: 1, 128>}]} {
    %c0 = arith.constant 0 : index
    %c0_0 = arith.constant 0 : index
    %0 = vector.load %arg1[%c0, %c0_0] : memref<16x128xf32, #tpu.memory_space<vmem>>, vector<16x128xf32>
    %1 = tpu.iota {dimensions = array<i32: 0>} : vector<32x128xi32>
    %c2_i32 = arith.constant 2 : i32
    %c0_i32 = arith.constant 0 : i32
    %2 = arith.cmpi eq, %c2_i32, %c0_i32 : i32
    %c1_i32 = arith.constant 1 : i32
    %3 = arith.select %2, %c1_i32, %c2_i32 : i32
    %4 = vector.broadcast %3 : i32 to vector<32x128xi32>
    %5 = arith.remsi %1, %4 : vector<32x128xi32>
    %c0_i32_1 = arith.constant 0 : i32
    %6 = vector.broadcast %c0_i32_1 : i32 to vector<32x128xi32>
    %7 = arith.cmpi ne, %5, %6 : vector<32x128xi32>
    %c0_i32_2 = arith.constant 0 : i32
    %8 = vector.broadcast %c0_i32_2 : i32 to vector<32x128xi32>
    %9 = arith.cmpi slt, %5, %8 : vector<32x128xi32>
    %c0_i32_3 = arith.constant 0 : i32
    %10 = arith.cmpi slt, %3, %c0_i32_3 : i32
    %11 = vector.broadcast %10 : i1 to vector<32x128xi1>
    %12 = vector.broadcast %11 : vector<32x128xi1> to vector<32x128xi1>
    %13 = arith.xori %9, %12 : vector<32x128xi1>
    %14 = arith.andi %13, %7 : vector<32x128xi1>
    %15 = vector.broadcast %3 : i32 to vector<32x128xi32>
    %16 = arith.addi %5, %15 : vector<32x128xi32>
    %17 = arith.select %14, %16, %5 : vector<32x128xi1>, vector<32x128xi32>
    %c0_i32_4 = arith.constant 0 : i32
    %18 = vector.broadcast %c0_i32_4 : i32 to vector<32x128xi32>
    %19 = arith.cmpi eq, %17, %18 : vector<32x128xi32>
    %c0_5 = arith.constant 0 : index
    %c0_6 = arith.constant 0 : index
    %20 = vector.load %arg2[%c0_5, %c0_6] : memref<32x16xf32, #tpu.memory_space<vmem>>, vector<32x16xf32>
    %cst = arith.constant dense<0.000000e+00> : vector<32x128xf32>
    %21 = tpu.matmul %20, %0, %cst {dimension_numbers = #tpu.dot_dimension_numbers<[1], [0], [0], [1], [0, 0, 1, 1], [], []>} : vector<32x16xf32>, vector<16x128xf32>, vector<32x128xf32> -> vector<32x128xf32>
    %c0_7 = arith.constant 0 : index
    %c0_8 = arith.constant 0 : index
    %22 = vector.load %arg3[%c0_7, %c0_8] : memref<32x1xf32, #tpu.memory_space<vmem>>, vector<32x1xf32>
    %23 = vector.broadcast %22 : vector<32x1xf32> to vector<32x128xf32>
    %24 = arith.addf %21, %23 : vector<32x128xf32>
    %c31_i32 = arith.constant 31 : i32
    %25 = tpu.dynamic_rotate %24 by %c31_i32 dim 0 : vector<32x128xf32>, i32 -> vector<32x128xf32>
    %c1_i32_9 = arith.constant 1 : i32
    %26 = tpu.dynamic_rotate %24 by %c1_i32_9 dim 0 : vector<32x128xf32>, i32 -> vector<32x128xf32>
    %27 = arith.minimumf %24, %25 : vector<32x128xf32>
    %28 = arith.maximumf %24, %26 : vector<32x128xf32>
    %29 = arith.select %19, %27, %28 : vector<32x128xi1>, vector<32x128xf32>
    %c0_10 = arith.constant 0 : index
    %c0_11 = arith.constant 0 : index
    %30 = vector.load %arg4[%c0_10, %c0_11] : memref<32x32xf32, #tpu.memory_space<vmem>>, vector<32x32xf32>
    %cst_12 = arith.constant dense<0.000000e+00> : vector<32x128xf32>
    %31 = tpu.matmul %30, %29, %cst_12 {dimension_numbers = #tpu.dot_dimension_numbers<[1], [0], [0], [1], [0, 0, 1, 1], [], []>} : vector<32x32xf32>, vector<32x128xf32>, vector<32x128xf32> -> vector<32x128xf32>
    %c0_13 = arith.constant 0 : index
    %c0_14 = arith.constant 0 : index
    %32 = vector.load %arg5[%c0_13, %c0_14] : memref<32x1xf32, #tpu.memory_space<vmem>>, vector<32x1xf32>
    %33 = vector.broadcast %32 : vector<32x1xf32> to vector<32x128xf32>
    %34 = arith.addf %31, %33 : vector<32x128xf32>
    %c31_i32_15 = arith.constant 31 : i32
    %35 = tpu.dynamic_rotate %34 by %c31_i32_15 dim 0 : vector<32x128xf32>, i32 -> vector<32x128xf32>
    %c1_i32_16 = arith.constant 1 : i32
    %36 = tpu.dynamic_rotate %34 by %c1_i32_16 dim 0 : vector<32x128xf32>, i32 -> vector<32x128xf32>
    %37 = arith.minimumf %34, %35 : vector<32x128xf32>
    %38 = arith.maximumf %34, %36 : vector<32x128xf32>
    %39 = arith.select %19, %37, %38 : vector<32x128xi1>, vector<32x128xf32>
    %c0_17 = arith.constant 0 : index
    %c0_18 = arith.constant 0 : index
    %40 = vector.load %arg6[%c0_17, %c0_18] : memref<1x32xf32, #tpu.memory_space<vmem>>, vector<1x32xf32>
    %cst_19 = arith.constant dense<0.000000e+00> : vector<1x128xf32>
    %41 = tpu.matmul %40, %39, %cst_19 {dimension_numbers = #tpu.dot_dimension_numbers<[1], [0], [0], [1], [0, 0, 1, 1], [], []>} : vector<1x32xf32>, vector<32x128xf32>, vector<1x128xf32> -> vector<1x128xf32>
    %c0_20 = arith.constant 0 : index
    %42 = memref.load %arg7[%c0_20] : memref<1xf32, #tpu.memory_space<smem>>
    %43 = vector.broadcast %42 : f32 to vector<1x128xf32>
    %44 = arith.addf %41, %43 : vector<1x128xf32>
    %c0_21 = arith.constant 0 : index
    %c0_22 = arith.constant 0 : index
    %45 = vector.load %arg8[%c0_21, %c0_22] : memref<1x128xf32, #tpu.memory_space<vmem>>, vector<1x128xf32>
    tpu.vector_store %arg8[%c0_21, %c0_22], %44 {strides = array<i32>} : memref<1x128xf32, #tpu.memory_space<vmem>>, vector<1x128xf32>,
    return
  }
  func.func @transform_0(%arg0: i32) -> (i32, i32) {
    %c0_i32 = arith.constant 0 : i32
    %c0_i32_0 = arith.constant 0 : i32
    return %c0_i32, %arg0 : i32, i32
  }
  func.func @transform_1(%arg0: i32) -> (i32, i32) {
    %c0_i32 = arith.constant 0 : i32
    %c0_i32_0 = arith.constant 0 : i32
    %c0_i32_1 = arith.constant 0 : i32
    return %c0_i32, %c0_i32_0 : i32, i32
  }
  func.func @transform_2(%arg0: i32) -> (i32, i32) {
    %c0_i32 = arith.constant 0 : i32
    %c0_i32_0 = arith.constant 0 : i32
    %c0_i32_1 = arith.constant 0 : i32
    return %c0_i32, %c0_i32_0 : i32, i32
  }
  func.func @transform_3(%arg0: i32) -> (i32, i32) {
    %c0_i32 = arith.constant 0 : i32
    %c0_i32_0 = arith.constant 0 : i32
    %c0_i32_1 = arith.constant 0 : i32
    return %c0_i32, %c0_i32_0 : i32, i32
  }
  func.func @transform_4(%arg0: i32) -> (i32, i32) {
    %c0_i32 = arith.constant 0 : i32
    %c0_i32_0 = arith.constant 0 : i32
    %c0_i32_1 = arith.constant 0 : i32
    return %c0_i32, %c0_i32_0 : i32, i32
  }
  func.func @transform_5(%arg0: i32) -> (i32, i32) {
    %c0_i32 = arith.constant 0 : i32
    %c0_i32_0 = arith.constant 0 : i32
    %c0_i32_1 = arith.constant 0 : i32
    return %c0_i32, %c0_i32_0 : i32, i32
  }
  func.func @transform_6(%arg0: i32) -> i32 {
    %c0_i32 = arith.constant 0 : i32
    %c0_i32_0 = arith.constant 0 : i32
    return %c0_i32 : i32
  }
  func.func @transform_7(%arg0: i32) -> (i32, i32) {
    %c0_i32 = arith.constant 0 : i32
    %c0_i32_0 = arith.constant 0 : i32
    return %c0_i32, %arg0 : i32, i32
  }
}

</mosaic_0001>

<llo_original>
// kernel: tpu_custom_call.1
$region0: #{tpu_custom_call.1}
  #allocation0 [shape = 'u32[]', space=smem, size = 0x4, offset = 0x4, fixed_abs, tag = 'smem constant byte address 0x4 - core index']
  #allocation1 [shape = 'u32[144,128]{1,0:T(1,128)}', space=vmem, size = 0x12000, scoped, tag = 'internal scratch']
  #allocation2 [shape = 'f32[1]{0:T(128)S(6)}', space=smem, size = 0x200, scoped, tag = 'scoped memory for tpu_custom_call.1']
  %s0 = inlined_call_operand.vmem [shape: f32[16,128], index: 0, kind: input, shape index: {}]
  %s1 = inlined_call_operand.vmem [shape: f32[32,16], index: 1, kind: input, shape index: {}]
  %s2 = inlined_call_operand.vmem [shape: f32[32,1], index: 2, kind: input, shape index: {}]
  %s3 = inlined_call_operand.vmem [shape: f32[32,32], index: 3, kind: input, shape index: {}]
  %s4 = inlined_call_operand.vmem [shape: f32[32,1], index: 4, kind: input, shape index: {}]
  %s5 = inlined_call_operand.vmem [shape: f32[1,32], index: 5, kind: input, shape index: {}]
  %s6 = inlined_call_operand.<no memory space> [shape: f32[1], index: 6, kind: input, shape index: {}]
  %s7 = inlined_call_operand.hbm [shape: f32[1,128], index: 7, kind: output, shape index: {}]
  %s8 = sld [smem:[#allocation0]]
  $region38: #{tpu_custom_call.1} parent=0
    _
  %s10 = ssub.s32 1, %s8
  %s11 = scalar_select 0, %s10, %s8
  %12 = sst [smem:[#allocation2]] %s6
  $region1: #{tpu_custom_call.1} parent=0
    #allocation3 [shape = 'u8[512]{0}', space=vmem, size = 0x400, scoped, tag = 'output window, operand 0, single buffered']
    #allocation4 [shape = 's32[1]{0}', space=sflag, size = 0x4, scoped, tag = 'scoped memory for tpu_custom_call.1']
    %13 = vsyncpa [#allocation4], 0
    // Predicated region
    $region2: #{tpu_custom_call.1} parent=1 // pred_check
      _
    $region3: #{tpu_custom_call.1} parent=1 // pred_check_branch
      %15 = sbr.rel (0) target = $region5
    $region4: #{tpu_custom_call.1} parent=1 // pred_region
      _
    $region5: #{tpu_custom_call.1} parent=1 // pred_fallthru
      _
    // Predicated region
    $region6: #{tpu_custom_call.1} parent=1 // pred_check
      _
    $region7: #{tpu_custom_call.1} parent=1 // pred_check_branch
      %17 = sbr.rel (0) target = $region9
    $region8: #{tpu_custom_call.1} parent=1 // pred_region
      _
    $region9: #{tpu_custom_call.1} parent=1 // pred_fallthru
      _
    // Predicated region
    $region10: #{tpu_custom_call.1} parent=1 // pred_check
      _
    $region11: #{tpu_custom_call.1} parent=1 // pred_check_branch
      %19 = sbr.rel (0) target = $region13
    $region12: #{tpu_custom_call.1} parent=1 // pred_region
      _
    $region13: #{tpu_custom_call.1} parent=1 // pred_fallthru
      _
    // Predicated region
    $region14: #{tpu_custom_call.1} parent=1 // pred_check
      _
    $region15: #{tpu_custom_call.1} parent=1 // pred_check_branch
      %21 = sbr.rel (0) target = $region17
    $region16: #{tpu_custom_call.1} parent=1 // pred_region
      _
    $region17: #{tpu_custom_call.1} parent=1 // pred_fallthru
      _
    // Predicated region
    $region18: #{tpu_custom_call.1} parent=1 // pred_check
      _
    $region19: #{tpu_custom_call.1} parent=1 // pred_check_branch
      %23 = sbr.rel (0) target = $region21
    $region20: #{tpu_custom_call.1} parent=1 // pred_region
      _
    $region21: #{tpu_custom_call.1} parent=1 // pred_fallthru
      _
    // Predicated region
    $region22: #{tpu_custom_call.1} parent=1 // pred_check
      _
    $region23: #{tpu_custom_call.1} parent=1 // pred_check_branch
      %25 = sbr.rel (0) target = $region25
    $region24: #{tpu_custom_call.1} parent=1 // pred_region
      _
    $region25: #{tpu_custom_call.1} parent=1 // pred_fallthru
      _
    // Predicated region
    $region26: #{tpu_custom_call.1} parent=1 // pred_check
      _
    $region27: #{tpu_custom_call.1} parent=1 // pred_check_branch
      %27 = sbr.rel (0) target = $region29
    $region28: #{tpu_custom_call.1} parent=1 // pred_region
      _
    $region29: #{tpu_custom_call.1} parent=1 // pred_fallthru
      _
    %v28 = vld [vmem:[%s0] sm:$0xff]
    %v29 = vld [vmem:[%s0 + $0x8] sm:$0xff]
    %v30 = vlaneseq
    %v31 = vshrl.u32 %v30, 7
    %v32 = vadd.s32 %v31, 8
    %v33 = vadd.s32 %v31, 16
    %v34 = vadd.s32 %v31, 24
    %vm35 = vcmp.lt.s32.totalorder %v31, 0
    %v36 = vsub.s32 0, %v31
    %v37 = vsel %vm35, %v36, %v31
    %v38 = vshrl.u32 %v37, 1
    %v39 = vand.u32 %v37, 1
    %v40 = vsub.s32 0, %v39
    %v41 = vsel %vm35, %v40, %v39
    %vm42 = vcmp.lt.s32.totalorder %v32, 0
    %v43 = vsub.s32 0, %v32
    %v44 = vsel %vm42, %v43, %v32
    %v45 = vshrl.u32 %v44, 1
    %v46 = vand.u32 %v44, 1
    %v47 = vsub.s32 0, %v46
    %v48 = vsel %vm42, %v47, %v46
    %vm49 = vcmp.lt.s32.totalorder %v33, 0
    %v50 = vsub.s32 0, %v33
    %v51 = vsel %vm49, %v50, %v33
    %v52 = vshrl.u32 %v51, 1
    %v53 = vand.u32 %v51, 1
    %v54 = vsub.s32 0, %v53
    %v55 = vsel %vm49, %v54, %v53
    %vm56 = vcmp.lt.s32.totalorder %v34, 0
    %v57 = vsub.s32 0, %v34
    %v58 = vsel %vm56, %v57, %v34
    %v59 = vshrl.u32 %v58, 1
    %v60 = vand.u32 %v58, 1
    %v61 = vsub.s32 0, %v60
    %v62 = vsel %vm56, %v61, %v60
    %vm63 = vcmp.ne.s32.totalorder %v41, 0
    %vm64 = vcmp.ne.s32.totalorder %v48, 0
    %vm65 = vcmp.ne.s32.totalorder %v55, 0
    %vm66 = vcmp.ne.s32.totalorder %v62, 0
    %vm67 = vcmp.lt.s32.totalorder %v41, 0
    %vm68 = vcmp.lt.s32.totalorder %v48, 0
    %vm69 = vcmp.lt.s32.totalorder %v55, 0
    %vm70 = vcmp.lt.s32.totalorder %v62, 0
    %vm71 = vmand %vm67, %vm63
    %vm72 = vmand %vm68, %vm64
    %vm73 = vmand %vm69, %vm65
    %vm74 = vmand %vm70, %vm66
    %v75 = vadd.s32 %v41, 2
    %v76 = vadd.s32 %v48, 2
    %v77 = vadd.s32 %v55, 2
    %v78 = vadd.s32 %v62, 2
    %v79 = vsel %vm71, %v75, %v41
    %v80 = vsel %vm72, %v76, %v48
    %v81 = vsel %vm73, %v77, %v55
    %v82 = vsel %vm74, %v78, %v62
    %vm83 = vcmp.eq.s32.totalorder %v79, 0
    %vm84 = vcmp.eq.s32.totalorder %v80, 0
    %vm85 = vcmp.eq.s32.totalorder %v81, 0
    %vm86 = vcmp.eq.s32.totalorder %v82, 0
    %v87 = vld [vmem:[%s1] sm:$0xff]
    %v88 = vld [vmem:[%s1 + $0x8] sm:$0xff]
    %v89 = vld [vmem:[%s1 + $0x10] sm:$0xff]
    %v90 = vld [vmem:[%s1 + $0x18] sm:$0xff]
    %v91 = vld [vmem:[%s2] sm:$0xff]
    %v92 = vld [vmem:[%s2 + $0x8] sm:$0xff]
    %v93 = vld [vmem:[%s2 + $0x10] sm:$0xff]
    %v94 = vld [vmem:[%s2 + $0x18] sm:$0xff]
    %96 = vset.pattern.permute.xlu0 0
    %97 = vperm.xlu0 %96, %v91
    %v98 = vpop.permute.xlu0 %97
    %101 = vset.pattern.permute.xlu0 0
    %102 = vperm.xlu0 %101, %v92
    %v103 = vpop.permute.xlu0 %102
    %106 = vset.pattern.permute.xlu0 0
    %107 = vperm.xlu0 %106, %v93
    %v108 = vpop.permute.xlu0 %107
    %111 = vset.pattern.permute.xlu0 0
    %112 = vperm.xlu0 %111, %v94
    %v113 = vpop.permute.xlu0 %112
    %vm115 = vcmask 130048
    %v117 = vsel %vm115, %v87, 0
    %v120 = vsel %vm115, %v88, 0
    %v123 = vsel %vm115, %v89, 0
    %v126 = vsel %vm115, %v90, 0
    %128 = vmatprep.subr.mxu0 0.0
    %129 = vmatpush1.msra.mxu0 %v28
    %130 = vmatprep.subr.mxu0 0.0
    %131 = vmatpush1.msra.mxu0 %v29
    %132 = vmatprep.subr.mxu0 0.0
    %133 = vmatpush1.msra.mxu0 0.0
    %134 = vmatprep.subr.mxu0 0.0
    %135 = vmatpush1.msra.mxu0 0.0
    %136 = vmatprep.subr.mxu0 0.0
    %137 = vmatpush1.msra.mxu0 0.0
    %138 = vmatprep.subr.mxu0 0.0
    %139 = vmatpush1.msra.mxu0 0.0
    %140 = vmatprep.subr.mxu0 0.0
    %141 = vmatpush1.msra.mxu0 0.0
    %142 = vmatprep.subr.mxu0 0.0
    %143 = vmatpush1.msra.mxu0 0.0
    %144 = vmatprep.subr.mxu0 0.0
    %145 = vmatpush1.msra.mxu0 0.0
    %146 = vmatprep.subr.mxu0 0.0
    %147 = vmatpush1.msra.mxu0 0.0
    %148 = vmatprep.subr.mxu0 0.0
    %149 = vmatpush1.msra.mxu0 0.0
    %150 = vmatprep.subr.mxu0 0.0
    %151 = vmatpush1.msra.mxu0 0.0
    %152 = vmatprep.subr.mxu0 0.0
    %153 = vmatpush1.msra.mxu0 0.0
    %154 = vmatprep.subr.mxu0 0.0
    %155 = vmatpush1.msra.mxu0 0.0
    %156 = vmatprep.subr.mxu0 0.0
    %157 = vmatpush1.msra.mxu0 0.0
    %158 = vmatprep.subr.mxu0 0.0
    %159 = vmatpush1.msra.mxu0 0.0
    %160 = vmatprep.subr.mxu0 0.0
    %161 = vmatpush1.msra.mxu0 0.0
    %162 = vmatprep.subr.mxu0 0.0
    %163 = vmatpush1.msra.mxu0 0.0
    %164 = vmatprep.subr.mxu0 0.0
    %165 = vmatpush1.msra.mxu0 0.0
    %166 = vmatprep.subr.mxu0 0.0
    %167 = vmatpush1.msra.mxu0 0.0
    %168 = vmatprep.subr.mxu0 0.0
    %169 = vmatpush1.msra.mxu0 0.0
    %170 = vmatprep.subr.mxu0 0.0
    %171 = vmatpush1.msra.mxu0 0.0
    %172 = vmatprep.subr.mxu0 0.0
    %173 = vmatpush1.msra.mxu0 0.0
    %174 = vmatprep.subr.mxu0 0.0
    %175 = vmatpush1.msra.mxu0 0.0
    %176 = vmatprep.subr.mxu0 0.0
    %177 = vmatpush1.msra.mxu0 0.0
    %178 = vmatprep.subr.mxu0 0.0
    %179 = vmatpush1.msra.mxu0 0.0
    %180 = vmatprep.subr.mxu0 0.0
    %181 = vmatpush1.msra.mxu0 0.0
    %182 = vmatprep.subr.mxu0 0.0
    %183 = vmatpush1.msra.mxu0 0.0
    %184 = vmatprep.subr.mxu0 0.0
    %185 = vmatpush1.msra.mxu0 0.0
    %186 = vmatprep.subr.mxu0 0.0
    %187 = vmatpush1.msra.mxu0 0.0
    %188 = vmatprep.subr.mxu0 0.0
    %189 = vmatpush1.msra.mxu0 0.0
    %190 = vmatprep.subr.mxu0 0.0
    %191 = vmatpush1.msra.mxu0 0.0
    %192 = vmatprep.mubr.f32.mxu0 0.0
    %193 = vmatmul.mubr.f32.gmra.mrb[0].mxu0 %v117
    %v194 = vpop.f32.mrb[0].mxu0
    %v195 = vadd.f32 %v98, %v194
    %v196 = vpop.f32.mrb[0].mxu0
    %197 = vmatprep.mubr.f32.mxu0 0.0
    %198 = vmatmul.mubr.f32.gmra.mrb[0].mxu0 %v120
    %v199 = vpop.f32.mrb[0].mxu0
    %v200 = vadd.f32 %v103, %v199
    %v201 = vpop.f32.mrb[0].mxu0
    %202 = vmatprep.mubr.f32.mxu0 0.0
    %203 = vmatmul.mubr.f32.gmra.mrb[0].mxu0 %v123
    %v204 = vpop.f32.mrb[0].mxu0
    %v205 = vadd.f32 %v108, %v204
    %v206 = vpop.f32.mrb[0].mxu0
    %207 = vmatprep.mubr.f32.mxu0 0.0
    %208 = vmatmul.mubr.f32.gmra.mrb[0].mxu0 %v126
    %v209 = vpop.f32.mrb[0].mxu0
    %v210 = vadd.f32 %v113, %v209
    %v211 = vpop.f32.mrb[0].mxu0
    %212 = vdwg.mxu0
    %v213 = vrot.slane %v195, 1
    %v214 = vrot.slane %v200, 1
    %v215 = vrot.slane %v205, 1
    %v216 = vrot.slane %v210, 1
    %vm217 = vcmp.lt.s32.totalorder %v31, 7
    %v218 = vsel %vm217, %v215, %v216
    %v219 = vsel %vm217, %v214, %v215
    %v220 = vsel %vm217, %v213, %v214
    %v221 = vsel %vm217, %v216, %v213
    %v222 = vrot.slane %v195, 7
    %v223 = vrot.slane %v200, 7
    %v224 = vrot.slane %v205, 7
    %v225 = vrot.slane %v210, 7
    %vm226 = vcmp.lt.s32.totalorder %v31, 1
    %v227 = vsel %vm226, %v224, %v225
    %v228 = vsel %vm226, %v223, %v224
    %v229 = vsel %vm226, %v222, %v223
    %v230 = vsel %vm226, %v225, %v222
    %v231 = vmin.f32 %v195, %v220
    %v232 = vmin.f32 %v200, %v219
    %v233 = vmin.f32 %v205, %v218
    %v234 = vmin.f32 %v210, %v221
    %v235 = vmax.f32 %v195, %v230
    %v236 = vmax.f32 %v200, %v229
    %v237 = vmax.f32 %v205, %v228
    %v238 = vmax.f32 %v210, %v227
    %v239 = vsel %vm83, %v231, %v235
    %v240 = vsel %vm84, %v232, %v236
    %v241 = vsel %vm85, %v233, %v237
    %v242 = vsel %vm86, %v234, %v238
    %v243 = vld [vmem:[%s3] sm:$0xff]
    %v244 = vld [vmem:[%s3 + $0x8] sm:$0xff]
    %v245 = vld [vmem:[%s3 + $0x10] sm:$0xff]
    %v246 = vld [vmem:[%s3 + $0x18] sm:$0xff]
    %v247 = vld [vmem:[%s4] sm:$0xff]
    %v248 = vld [vmem:[%s4 + $0x8] sm:$0xff]
    %v249 = vld [vmem:[%s4 + $0x10] sm:$0xff]
    %v250 = vld [vmem:[%s4 + $0x18] sm:$0xff]
    %252 = vset.pattern.permute.xlu0 0
    %253 = vperm.xlu0 %252, %v247
    %v254 = vpop.permute.xlu0 %253
    %257 = vset.pattern.permute.xlu0 0
    %258 = vperm.xlu0 %257, %v248
    %v259 = vpop.permute.xlu0 %258
    %262 = vset.pattern.permute.xlu0 0
    %263 = vperm.xlu0 %262, %v249
    %v264 = vpop.permute.xlu0 %263
    %267 = vset.pattern.permute.xlu0 0
    %268 = vperm.xlu0 %267, %v250
    %v269 = vpop.permute.xlu0 %268
    %vm271 = vcmask 261120
    %v273 = vsel %vm271, %v243, 0
    %v276 = vsel %vm271, %v244, 0
    %v279 = vsel %vm271, %v245, 0
    %v282 = vsel %vm271, %v246, 0
    %284 = vmatprep.subr.mxu0 0.0
    %285 = vmatpush1.msra.mxu0 %v239
    %286 = vmatprep.subr.mxu0 0.0
    %287 = vmatpush1.msra.mxu0 %v240
    %288 = vmatprep.subr.mxu0 0.0
    %289 = vmatpush1.msra.mxu0 %v241
    %290 = vmatprep.subr.mxu0 0.0
    %291 = vmatpush1.msra.mxu0 %v242
    %292 = vmatprep.subr.mxu0 0.0
    %293 = vmatpush1.msra.mxu0 0.0
    %294 = vmatprep.subr.mxu0 0.0
    %295 = vmatpush1.msra.mxu0 0.0
    %296 = vmatprep.subr.mxu0 0.0
    %297 = vmatpush1.msra.mxu0 0.0
    %298 = vmatprep.subr.mxu0 0.0
    %299 = vmatpush1.msra.mxu0 0.0
    %300 = vmatprep.subr.mxu0 0.0
    %301 = vmatpush1.msra.mxu0 0.0
    %302 = vmatprep.subr.mxu0 0.0
    %303 = vmatpush1.msra.mxu0 0.0
    %304 = vmatprep.subr.mxu0 0.0
    %305 = vmatpush1.msra.mxu0 0.0
    %306 = vmatprep.subr.mxu0 0.0
    %307 = vmatpush1.msra.mxu0 0.0
    %308 = vmatprep.subr.mxu0 0.0
    %309 = vmatpush1.msra.mxu0 0.0
    %310 = vmatprep.subr.mxu0 0.0
    %311 = vmatpush1.msra.mxu0 0.0
    %312 = vmatprep.subr.mxu0 0.0
    %313 = vmatpush1.msra.mxu0 0.0
    %314 = vmatprep.subr.mxu0 0.0
    %315 = vmatpush1.msra.mxu0 0.0
    %316 = vmatprep.subr.mxu0 0.0
    %317 = vmatpush1.msra.mxu0 0.0
    %318 = vmatprep.subr.mxu0 0.0
    %319 = vmatpush1.msra.mxu0 0.0
    %320 = vmatprep.subr.mxu0 0.0
    %321 = vmatpush1.msra.mxu0 0.0
    %322 = vmatprep.subr.mxu0 0.0
    %323 = vmatpush1.msra.mxu0 0.0
    %324 = vmatprep.subr.mxu0 0.0
    %325 = vmatpush1.msra.mxu0 0.0
    %326 = vmatprep.subr.mxu0 0.0
    %327 = vmatpush1.msra.mxu0 0.0
    %328 = vmatprep.subr.mxu0 0.0
    %329 = vmatpush1.msra.mxu0 0.0
    %330 = vmatprep.subr.mxu0 0.0
    %331 = vmatpush1.msra.mxu0 0.0
    %332 = vmatprep.subr.mxu0 0.0
    %333 = vmatpush1.msra.mxu0 0.0
    %334 = vmatprep.subr.mxu0 0.0
    %335 = vmatpush1.msra.mxu0 0.0
    %336 = vmatprep.subr.mxu0 0.0
    %337 = vmatpush1.msra.mxu0 0.0
    %338 = vmatprep.subr.mxu0 0.0
    %339 = vmatpush1.msra.mxu0 0.0
    %340 = vmatprep.subr.mxu0 0.0
    %341 = vmatpush1.msra.mxu0 0.0
    %342 = vmatprep.subr.mxu0 0.0
    %343 = vmatpush1.msra.mxu0 0.0
    %344 = vmatprep.subr.mxu0 0.0
    %345 = vmatpush1.msra.mxu0 0.0
    %346 = vmatprep.subr.mxu0 0.0
    %347 = vmatpush1.msra.mxu0 0.0
    %348 = vmatprep.mubr.f32.mxu0 0.0
    %349 = vmatmul.mubr.f32.gmra.mrb[0].mxu0 %v273
    %v350 = vpop.f32.mrb[0].mxu0
    %v351 = vadd.f32 %v254, %v350
    %v352 = vpop.f32.mrb[0].mxu0
    %353 = vmatprep.mubr.f32.mxu0 0.0
    %354 = vmatmul.mubr.f32.gmra.mrb[0].mxu0 %v276
    %v355 = vpop.f32.mrb[0].mxu0
    %v356 = vadd.f32 %v259, %v355
    %v357 = vpop.f32.mrb[0].mxu0
    %358 = vmatprep.mubr.f32.mxu0 0.0
    %359 = vmatmul.mubr.f32.gmra.mrb[0].mxu0 %v279
    %v360 = vpop.f32.mrb[0].mxu0
    %v361 = vadd.f32 %v264, %v360
    %v362 = vpop.f32.mrb[0].mxu0
    %363 = vmatprep.mubr.f32.mxu0 0.0
    %364 = vmatmul.mubr.f32.gmra.mrb[0].mxu0 %v282
    %v365 = vpop.f32.mrb[0].mxu0
    %v366 = vadd.f32 %v269, %v365
    %v367 = vpop.f32.mrb[0].mxu0
    %368 = vdwg.mxu0
    %v369 = vrot.slane %v351, 1
    %v370 = vrot.slane %v356, 1
    %v371 = vrot.slane %v361, 1
    %v372 = vrot.slane %v366, 1
    %v373 = vsel %vm217, %v371, %v372
    %v374 = vsel %vm217, %v370, %v371
    %v375 = vsel %vm217, %v369, %v370
    %v376 = vsel %vm217, %v372, %v369
    %v377 = vrot.slane %v351, 7
    %v378 = vrot.slane %v356, 7
    %v379 = vrot.slane %v361, 7
    %v380 = vrot.slane %v366, 7
    %v381 = vsel %vm226, %v379, %v380
    %v382 = vsel %vm226, %v378, %v379
    %v383 = vsel %vm226, %v377, %v378
    %v384 = vsel %vm226, %v380, %v377
    %v385 = vmin.f32 %v351, %v375
    %v386 = vmin.f32 %v356, %v374
    %v387 = vmin.f32 %v361, %v373
    %v388 = vmin.f32 %v366, %v376
    %v389 = vmax.f32 %v351, %v384
    %v390 = vmax.f32 %v356, %v383
    %v391 = vmax.f32 %v361, %v382
    %v392 = vmax.f32 %v366, %v381
    %v393 = vsel %vm83, %v385, %v389
    %v394 = vsel %vm84, %v386, %v390
    %v395 = vsel %vm85, %v387, %v391
    %v396 = vsel %vm86, %v388, %v392
    %v397 = vld [vmem:[%s5] sm:$0x1]
    %s398 = sld [smem:[#allocation2]]
    %v399 = vstv %s398
    %v401 = vsel %vm271, %v397, 0
    %403 = vmatprep.subr.mxu0 0.0
    %404 = vmatpush1.msra.mxu0 %v393
    %405 = vmatprep.subr.mxu0 0.0
    %406 = vmatpush1.msra.mxu0 %v394
    %407 = vmatprep.subr.mxu0 0.0
    %408 = vmatpush1.msra.mxu0 %v395
    %409 = vmatprep.subr.mxu0 0.0
    %410 = vmatpush1.msra.mxu0 %v396
    %411 = vmatprep.subr.mxu0 0.0
    %412 = vmatpush1.msra.mxu0 0.0
    %413 = vmatprep.subr.mxu0 0.0
    %414 = vmatpush1.msra.mxu0 0.0
    %415 = vmatprep.subr.mxu0 0.0
    %416 = vmatpush1.msra.mxu0 0.0
    %417 = vmatprep.subr.mxu0 0.0
    %418 = vmatpush1.msra.mxu0 0.0
    %419 = vmatprep.subr.mxu0 0.0
    %420 = vmatpush1.msra.mxu0 0.0
    %421 = vmatprep.subr.mxu0 0.0
    %422 = vmatpush1.msra.mxu0 0.0
    %423 = vmatprep.subr.mxu0 0.0
    %424 = vmatpush1.msra.mxu0 0.0
    %425 = vmatprep.subr.mxu0 0.0
    %426 = vmatpush1.msra.mxu0 0.0
    %427 = vmatprep.subr.mxu0 0.0
    %428 = vmatpush1.msra.mxu0 0.0
    %429 = vmatprep.subr.mxu0 0.0
    %430 = vmatpush1.msra.mxu0 0.0
    %431 = vmatprep.subr.mxu0 0.0
    %432 = vmatpush1.msra.mxu0 0.0
    %433 = vmatprep.subr.mxu0 0.0
    %434 = vmatpush1.msra.mxu0 0.0
    %435 = vmatprep.subr.mxu0 0.0
    %436 = vmatpush1.msra.mxu0 0.0
    %437 = vmatprep.subr.mxu0 0.0
    %438 = vmatpush1.msra.mxu0 0.0
    %439 = vmatprep.subr.mxu0 0.0
    %440 = vmatpush1.msra.mxu0 0.0
    %441 = vmatprep.subr.mxu0 0.0
    %442 = vmatpush1.msra.mxu0 0.0
    %443 = vmatprep.subr.mxu0 0.0
    %444 = vmatpush1.msra.mxu0 0.0
    %445 = vmatprep.subr.mxu0 0.0
    %446 = vmatpush1.msra.mxu0 0.0
    %447 = vmatprep.subr.mxu0 0.0
    %448 = vmatpush1.msra.mxu0 0.0
    %449 = vmatprep.subr.mxu0 0.0
    %450 = vmatpush1.msra.mxu0 0.0
    %451 = vmatprep.subr.mxu0 0.0
    %452 = vmatpush1.msra.mxu0 0.0
    %453 = vmatprep.subr.mxu0 0.0
    %454 = vmatpush1.msra.mxu0 0.0
    %455 = vmatprep.subr.mxu0 0.0
    %456 = vmatpush1.msra.mxu0 0.0
    %457 = vmatprep.subr.mxu0 0.0
    %458 = vmatpush1.msra.mxu0 0.0
    %459 = vmatprep.subr.mxu0 0.0
    %460 = vmatpush1.msra.mxu0 0.0
    %461 = vmatprep.subr.mxu0 0.0
    %462 = vmatpush1.msra.mxu0 0.0
    %463 = vmatprep.subr.mxu0 0.0
    %464 = vmatpush1.msra.mxu0 0.0
    %465 = vmatprep.subr.mxu0 0.0
    %466 = vmatpush1.msra.mxu0 0.0
    %467 = vmatprep.mubr.f32.mxu0 0.0
    %468 = vmatmul.mubr.f32.gmra.mrb[0].mxu0 %v401
    %v469 = vpop.f32.mrb[0].mxu0
    %v470 = vadd.f32 %v399, %v469
    %v471 = vpop.f32.mrb[0].mxu0
    %472 = vdwg.mxu0
    %473 = vst [vmem:[#allocation3] sm:$0x1] %v470
    // Predicated region
    $region30: #{tpu_custom_call.1} parent=1 // pred_check
      _
    $region31: #{tpu_custom_call.1} parent=1 // pred_check_branch
      %475 = sbr.rel (0) target = $region33
    $region32: #{tpu_custom_call.1} parent=1 // pred_region
      %s477 = ssub.s32 16, 16
      %478 = vsyncadd [#allocation4], %s477
      %s480 = sshll.u32 [#allocation3], 4
      %s481 = int_to_ptr.vmem [resolvable:$true] %s480
      %483 = dma.vmem_to_hbm [thread:$0]  %s481, 16, %s7, [#allocation4]
    $region33: #{tpu_custom_call.1} parent=1 // pred_fallthru
      _
    // Predicated region
    $region34: #{tpu_custom_call.1} parent=1 // pred_check
      _
    $region35: #{tpu_custom_call.1} parent=1 // pred_check_branch
      %485 = sbr.rel (0) target = $region37
    $region36: #{tpu_custom_call.1} parent=1 // pred_region
      %486 = dma.done [#allocation4], 16
    $region37: #{tpu_custom_call.1} parent=1 // pred_fallthru
      _
    %487 = vsyncpa [#allocation4], 1

</llo_original>
